<compile_context>
chip_gen: v7x
topology: tpu7x:2x2x1
jax: 0.10.0
libtpu: 0.0.40
codegen_flags: <defaults>
</compile_context>

<pallas_src>
import functools

import jax
import jax.numpy as jnp
from jax import lax
from jax.experimental import pallas as pl
from jax.experimental.pallas import tpu as pltpu

LANE = 128      # lane width
SUBLANE = 8     # sublane width
K_TILE_MAX = 512   # d_in (reduction) tile: multiple of 128 (v5e MXU) and 256 (v6e/v7x MXU)
N_TILE_MAX = 512   # num_classes tile
B_TILE_MAX = 128   # batch tile
VMEM_LIMIT = 48 << 20  # safe headroom on all generations (v7x physical VMEM = 64 MiB)


def _round_up(n, m):
    return (n + m - 1) // m * m


def _pick_tile(n, max_tile, align):
    """Return (tile, padded_size) with tile % align == 0 and padded_size % tile == 0."""
    n_aligned = _round_up(n, align)
    tile = min(max_tile, n_aligned)
    return tile, _round_up(n_aligned, tile)


# ---------------------------------------------------------------------------
# Kernels
# ---------------------------------------------------------------------------

def _base_feature_kernel(x_ref, wb_ref, bb_ref, feat_ref, acc_ref, *, normalize):
    """features = relu(x @ Wb^T + b); optionally L2-normalize along dim.

    Grid = (batch tiles, K tiles); K is the reduction axis (last, "arbitrary").
    x_ref : (Bt, Kt)       wb_ref : (dim_p, Kt)   -- PyTorch (out, in) layout
    bb_ref: (1, dim_p)     feat_ref / acc_ref : (Bt, dim_p)
    """
    k = pl.program_id(1)

    @pl.when(k == 0)
    def _():
        acc_ref[...] = jnp.zeros_like(acc_ref)

    # Contract on the shared K axis of x (axis 1) and Wb (axis 1): no transpose.
    acc_ref[...] += lax.dot_general(
        x_ref[...], wb_ref[...],
        dimension_numbers=(((1,), (1,)), ((), ())),
        preferred_element_type=jnp.float32)

    @pl.when(k == pl.num_programs(1) - 1)
    def _():
        feats = jnp.maximum(acc_ref[...] + bb_ref[...], 0.0)
        if normalize:
            # torch F.normalize(p=2, dim=1): x / max(||x||, 1e-12)
            sumsq = jnp.sum(feats * feats, axis=1, keepdims=True)
            feats = feats * lax.rsqrt(jnp.maximum(sumsq, 1e-24))
        feat_ref[...] = feats.astype(feat_ref.dtype)


def _fc_kernel(feat_ref, wfc_ref, logit_ref):
    """logits = features @ Wfc^T  (bias-free Linear, PyTorch (out, in) layout)."""
    logit_ref[...] = lax.dot_general(
        feat_ref[...], wfc_ref[...],
        dimension_numbers=(((1,), (1,)), ((), ())),
        preferred_element_type=jnp.float32).astype(logit_ref.dtype)


# ---------------------------------------------------------------------------
# pallas_call wrappers
# ---------------------------------------------------------------------------

def _base_features(x_pad, wb_pad, bb_pad, *, b_tile, k_tile, normalize):
    b_p, k_p = x_pad.shape
    dim_p = wb_pad.shape[0]
    nb, nk = b_p // b_tile, k_p // k_tile
    itm = x_pad.dtype.itemsize

    return pl.pallas_call(
        functools.partial(_base_feature_kernel, normalize=normalize),
        out_shape=jax.ShapeDtypeStruct((b_p, dim_p), jnp.float32),
        grid_spec=pltpu.PrefetchScalarGridSpec(
            num_scalar_prefetch=0,
            grid=(nb, nk),
            in_specs=[
                pl.BlockSpec((b_tile, k_tile), lambda i, k: (i, k)),
                pl.BlockSpec((dim_p, k_tile), lambda i, k: (0, k)),
                pl.BlockSpec((1, dim_p), lambda i, k: (0, 0)),
            ],
            out_specs=pl.BlockSpec((b_tile, dim_p), lambda i, k: (i, 0)),
            scratch_shapes=[pltpu.VMEM((b_tile, dim_p), jnp.float32)],
        ),
        compiler_params=pltpu.CompilerParams(
            dimension_semantics=("parallel", "arbitrary"),
            vmem_limit_bytes=VMEM_LIMIT),
        cost_estimate=pl.CostEstimate(
            flops=2 * b_p * k_p * dim_p,
            transcendentals=b_p if normalize else 0,
            bytes_accessed=itm * (b_p * k_p + nb * dim_p * k_p + dim_p)
            + 4 * b_p * dim_p),
    )(x_pad, wb_pad, bb_pad)


def _fc_logits(feats_pad, wfc_pad, *, b_tile, n_tile):
    b_p, dim_p = feats_pad.shape
    nc_p = wfc_pad.shape[0]
    nb, nn = b_p // b_tile, nc_p // n_tile
    itm = feats_pad.dtype.itemsize

    return pl.pallas_call(
        _fc_kernel,
        out_shape=jax.ShapeDtypeStruct((b_p, nc_p), jnp.float32),
        grid_spec=pltpu.PrefetchScalarGridSpec(
            num_scalar_prefetch=0,
            grid=(nb, nn),
            in_specs=[
                pl.BlockSpec((b_tile, dim_p), lambda i, j: (i, 0)),
                pl.BlockSpec((n_tile, dim_p), lambda i, j: (j, 0)),
            ],
            out_specs=pl.BlockSpec((b_tile, n_tile), lambda i, j: (i, j)),
        ),
        compiler_params=pltpu.CompilerParams(
            dimension_semantics=("parallel", "parallel"),
            vmem_limit_bytes=VMEM_LIMIT),
        cost_estimate=pl.CostEstimate(
            flops=2 * b_p * dim_p * nc_p,
            transcendentals=0,
            bytes_accessed=itm * (b_p * dim_p + nc_p * dim_p) + 4 * b_p * nc_p),
    )(feats_pad, wfc_pad)


# ---------------------------------------------------------------------------
# Parameter preparation (one-time) and forward passes
# ---------------------------------------------------------------------------

def prepare_clnet_params(w_base, b_base, w_fc=None, compute_dtype=jnp.float32):
    """One-time layout prep: pad to lane/sublane/tile-friendly shapes.

    Keeps PyTorch (out_features, in_features) layout, so no transpose is ever
    materialized (kernels contract on the shared axis via dot_general).
    Pass compute_dtype=jnp.bfloat16 to halve weight DMA and hit MXU peak
    (accumulation stays f32 inside the kernels).
    """
    dim, d_in = w_base.shape
    dim_p = _round_up(dim, LANE)
    k_tile, k_p = _pick_tile(d_in, K_TILE_MAX, LANE)

    wb = jnp.zeros((dim_p, k_p), compute_dtype).at[:dim, :d_in].set(
        w_base.astype(compute_dtype))
    bb = jnp.zeros((1, dim_p), jnp.float32).at[0, :dim].set(
        b_base.astype(jnp.float32))

    params = dict(wb=wb, bb=bb, dim=dim, dim_p=dim_p, d_in=d_in,
                  k_tile=k_tile, k_p=k_p, compute_dtype=compute_dtype)

    if w_fc is not None:
        num_classes = w_fc.shape[0]
        n_tile, nc_p = _pick_tile(num_classes, N_TILE_MAX, LANE)
        wfc = jnp.zeros((nc_p, dim_p), compute_dtype).at[:num_classes, :dim].set(
            w_fc.astype(compute_dtype))
        params.update(wfc=wfc, num_classes=num_classes, n_tile=n_tile, nc_p=nc_p)
    return params


def _pad_input(x_nchw, params):
    B = x_nchw.shape[0]
    d_in, k_p = params["d_in"], params["k_p"]
    cd = params["compute_dtype"]
    b_tile, b_p = _pick_tile(B, B_TILE_MAX, SUBLANE)
    x_flat = x_nchw.reshape(B, d_in).astype(cd)       # row-major NCHW flatten
    x_pad = jnp.zeros((b_p, k_p), cd).at[:B, :d_in].set(x_flat)
    return x_pad, b_tile, B


def clnet_forward_train(x_nchw, params):
    """Training path: returns (features (B, dim), logits (B, num_classes))."""
    x_pad, b_tile, B = _pad_input(x_nchw, params)
    feats_pad = _base_features(x_pad, params["wb"], params["bb"],
                               b_tile=b_tile, k_tile=params["k_tile"],
                               normalize=False)
    logits_pad = _fc_logits(feats_pad.astype(params["compute_dtype"]), params["wfc"],
                            b_tile=b_tile, n_tile=params["n_tile"])
    return (feats_pad[:B, :params["dim"]],
            logits_pad[:B, :params["num_classes"]])


def clnet_forward_eval(x_nchw, params):
    """Eval path: returns L2-normalized embeddings (B, dim)."""
    x_pad, b_tile, B = _pad_input(x_nchw, params)
    emb_pad = _base_features(x_pad, params["wb"], params["bb"],
                             b_tile=b_tile, k_tile=params["k_tile"],
                             normalize=True)
    return emb_pad[:B, :params["dim"]]


# ---------------------------------------------------------------------------
# Main
# ---------------------------------------------------------------------------

if __name__ == "__main__":
    B, C, H, W = 2, 4, 16, 16
    dim = 32
    num_classes = 16
    d_in = C * H * W  # 1024 -> 2 K-tiles of 512, exercising the accumulator path

    key = jax.random.PRNGKey(0)
    kx, kwb, kbb, kwfc = jax.random.split(key, 4)

    x = jax.random.normal(kx, (B, C, H, W), dtype=jnp.float32)
    w_base = jax.random.normal(kwb, (dim, d_in), jnp.float32) * (1.0 / jnp.sqrt(d_in))
    b_base = jax.random.normal(kbb, (dim,), jnp.float32) * 0.01
    w_fc = jax.random.normal(kwfc, (num_classes, dim), jnp.float32) * (1.0 / jnp.sqrt(dim))

    # ---- f32 path (exact parity with the PyTorch reference) -----------------
    params = prepare_clnet_params(w_base, b_base, w_fc, compute_dtype=jnp.float32)

    feats, logits = jax.block_until_ready(clnet_forward_train(x, params))
    emb = jax.block_until_ready(clnet_forward_eval(x, params))
    assert feats.shape == (B, dim) and logits.shape == (B, num_classes)
    assert emb.shape == (B, dim)

    # Plain-JAX reference.
    x_flat = x.reshape(B, d_in)
    feats_ref = jnp.maximum(x_flat @ w_base.T + b_base, 0.0)
    logits_ref = feats_ref @ w_fc.T
    norm_ref = jnp.maximum(
        jnp.sqrt(jnp.sum(feats_ref * feats_ref, axis=1, keepdims=True)), 1e-12)
    emb_ref = feats_ref / norm_ref

    assert jnp.allclose(feats, feats_ref, atol=1e-5, rtol=1e-5)
    assert jnp.allclose(logits, logits_ref, atol=1e-5, rtol=1e-5)
    assert jnp.allclose(emb, emb_ref, atol=1e-5, rtol=1e-5)

    # ---- bf16 compute path (f32 accumulation) -------------------------------
    params_bf16 = prepare_clnet_params(w_base, b_base, w_fc,
                                       compute_dtype=jnp.bfloat16)
    feats16, logits16 = jax.block_until_ready(clnet_forward_train(x, params_bf16))
    emb16 = jax.block_until_ready(clnet_forward_eval(x, params_bf16))
    assert jnp.allclose(feats16, feats_ref, atol=1e-1, rtol=1e-1)
    assert jnp.allclose(logits16, logits_ref, atol=1e-1, rtol=1e-1)
    assert jnp.allclose(emb16, emb_ref, atol=1e-1, rtol=1e-1)

    print("KERNEL_OK")
</pallas_src>

<mosaic_0001>
module attributes {stable_mosaic.version = 11 : i64} {
  func.func @_base_feature_kernel(%arg0: i32, %arg1: i32, %arg2: memref<8x512xf32, #tpu.memory_space<vmem>>, %arg3: memref<128x512xf32, #tpu.memory_space<vmem>>, %arg4: memref<1x128xf32, #tpu.memory_space<vmem>>, %arg5: memref<8x128xf32, #tpu.memory_space<vmem>>, %arg6: memref<8x128xf32, #tpu.memory_space<vmem>>) attributes {dimension_semantics = [#tpu.dimension_semantics<parallel>, #tpu.dimension_semantics<arbitrary>], iteration_bounds = array<i64: 1, 2>, scalar_prefetch = 0 : i64, scratch_operands = 1 : i64, tpu.core_type = #tpu.core_type<tc>, window_params = [{transform_indices = @transform_0, window_bounds = array<i64: 8, 512>}, {transform_indices = @transform_1, window_bounds = array<i64: 128, 512>}, {pipeline_mode = #tpu.pipeline_mode<synchronous>, transform_indices = @transform_2, window_bounds = array<i64: 1, 128>}, {transform_indices = @transform_3, window_bounds = array<i64: 8, 128>}]} {
    %c0_i32 = arith.constant 0 : i32
    %0 = arith.cmpi eq, %arg1, %c0_i32 : i32
    %1 = arith.extui %0 : i1 to i32
    %c0_i32_0 = arith.constant 0 : i32
    %2 = arith.cmpi ne, %1, %c0_i32_0 : i32
    scf.if %2 {
      %cst_9 = arith.constant 0.000000e+00 : f32
      %12 = vector.broadcast %cst_9 : f32 to vector<8x128xf32>
      %c0_10 = arith.constant 0 : index
      %c0_11 = arith.constant 0 : index
      %13 = vector.load %arg6[%c0_10, %c0_11] : memref<8x128xf32, #tpu.memory_space<vmem>>, vector<8x128xf32>
      tpu.vector_store %arg6[%c0_10, %c0_11], %12 {strides = array<i32>} : memref<8x128xf32, #tpu.memory_space<vmem>>, vector<8x128xf32>,
    } else {
    }
    %c0 = arith.constant 0 : index
    %c0_1 = arith.constant 0 : index
    %3 = vector.load %arg6[%c0, %c0_1] : memref<8x128xf32, #tpu.memory_space<vmem>>, vector<8x128xf32>
    %c0_2 = arith.constant 0 : index
    %c0_3 = arith.constant 0 : index
    %4 = vector.load %arg2[%c0_2, %c0_3] : memref<8x512xf32, #tpu.memory_space<vmem>>, vector<8x512xf32>
    %c0_4 = arith.constant 0 : index
    %c0_5 = arith.constant 0 : index
    %5 = vector.load %arg3[%c0_4, %c0_5] : memref<128x512xf32, #tpu.memory_space<vmem>>, vector<128x512xf32>
    %cst = arith.constant dense<0.000000e+00> : vector<8x128xf32>
    %6 = tpu.matmul %4, %5, %cst {dimension_numbers = #tpu.dot_dimension_numbers<[1], [1], [0], [0], [0, 0, 1, 0], [], []>} : vector<8x512xf32>, vector<128x512xf32>, vector<8x128xf32> -> vector<8x128xf32>
    %7 = arith.addf %3, %6 : vector<8x128xf32>
    %c0_6 = arith.constant 0 : index
    %c0_7 = arith.constant 0 : index
    %8 = vector.load %arg6[%c0_6, %c0_7] : memref<8x128xf32, #tpu.memory_space<vmem>>, vector<8x128xf32>
    tpu.vector_store %arg6[%c0_6, %c0_7], %7 {strides = array<i32>} : memref<8x128xf32, #tpu.memory_space<vmem>>, vector<8x128xf32>,
    %c1_i32 = arith.constant 1 : i32
    %9 = arith.cmpi eq, %arg1, %c1_i32 : i32
    %10 = arith.extui %9 : i1 to i32
    %c0_i32_8 = arith.constant 0 : i32
    %11 = arith.cmpi ne, %10, %c0_i32_8 : i32
    scf.if %11 {
      %c0_9 = arith.constant 0 : index
      %c0_10 = arith.constant 0 : index
      %12 = vector.load %arg6[%c0_9, %c0_10] : memref<8x128xf32, #tpu.memory_space<vmem>>, vector<8x128xf32>
      %c0_11 = arith.constant 0 : index
      %c0_12 = arith.constant 0 : index
      %13 = vector.load %arg4[%c0_11, %c0_12] : memref<1x128xf32, #tpu.memory_space<vmem>>, vector<1x128xf32>
      %14 = vector.broadcast %13 : vector<1x128xf32> to vector<8x128xf32>
      %15 = arith.addf %12, %14 : vector<8x128xf32>
      %cst_13 = arith.constant 0.000000e+00 : f32
      %16 = vector.broadcast %cst_13 : f32 to vector<8x128xf32>
      %17 = arith.maximumf %15, %16 : vector<8x128xf32>
      %c0_14 = arith.constant 0 : index
      %c0_15 = arith.constant 0 : index
      %18 = vector.load %arg5[%c0_14, %c0_15] : memref<8x128xf32, #tpu.memory_space<vmem>>, vector<8x128xf32>
      tpu.vector_store %arg5[%c0_14, %c0_15], %17 {strides = array<i32>} : memref<8x128xf32, #tpu.memory_space<vmem>>, vector<8x128xf32>,
    } else {
    }
    return
  }
  func.func @transform_0(%arg0: i32, %arg1: i32) -> (i32, i32) {
    %c0_i32 = arith.constant 0 : i32
    return %arg0, %arg1 : i32, i32
  }
  func.func @transform_1(%arg0: i32, %arg1: i32) -> (i32, i32) {
    %c0_i32 = arith.constant 0 : i32
    %c0_i32_0 = arith.constant 0 : i32
    return %c0_i32, %arg1 : i32, i32
  }
  func.func @transform_2(%arg0: i32, %arg1: i32) -> (i32, i32) {
    %c0_i32 = arith.constant 0 : i32
    %c0_i32_0 = arith.constant 0 : i32
    %c0_i32_1 = arith.constant 0 : i32
    return %c0_i32, %c0_i32_0 : i32, i32
  }
  func.func @transform_3(%arg0: i32, %arg1: i32) -> (i32, i32) {
    %c0_i32 = arith.constant 0 : i32
    %c0_i32_0 = arith.constant 0 : i32
    return %arg0, %c0_i32 : i32, i32
  }
}

</mosaic_0001>

<llo_original>
// kernel: tpu_custom_call.1
$region0: #{tpu_custom_call.1}
  #allocation0 [shape = 'u32[]', space=smem, size = 0x4, offset = 0x4, fixed_abs, tag = 'smem constant byte address 0x4 - core index']
  #allocation1 [shape = 'u32[144,128]{1,0:T(1,128)}', space=vmem, size = 0x12000, scoped, tag = 'internal scratch']
  #allocation2 [shape = 'f32[8,128]{1,0:T(8,128)}', space=vmem, size = 0x1000, scoped, tag = 'scratch operand']
  %s0 = inlined_call_operand.hbm [shape: f32[8,1024], index: 0, kind: input, shape index: {}]
  %s1 = inlined_call_operand.hbm [shape: f32[128,1024], index: 1, kind: input, shape index: {}]
  %s2 = inlined_call_operand.vmem [shape: f32[1,128], index: 2, kind: input, shape index: {}]
  %s3 = inlined_call_operand.hbm [shape: f32[8,128], index: 3, kind: output, shape index: {}]
  %s4 = sld [smem:[#allocation0]]
  $region61: #{tpu_custom_call.1} parent=0
    _
  %s6 = ssub.s32 1, %s4
  %s7 = scalar_select 0, %s6, %s4
  $region1: #{tpu_custom_call.1} parent=0
    #allocation3 [shape = 'u8[32768]{0}', space=vmem, size = 0x8000, scoped, tag = 'input window, operand 0']
    #allocation4 [shape = 's32[2]{0}', space=sflag, size = 0x8, scoped, tag = 'scoped memory for tpu_custom_call.1']
    #allocation5 [shape = 's32[2]{0}', space=sflag, size = 0x8, scoped, tag = 'scoped memory for tpu_custom_call.1']
    #allocation6 [shape = 'u8[524288]{0}', space=vmem, size = 0x80000, scoped, tag = 'input window, operand 1']
    #allocation7 [shape = 's32[2]{0}', space=sflag, size = 0x8, scoped, tag = 'scoped memory for tpu_custom_call.1']
    #allocation8 [shape = 'u8[4096]{0}', space=vmem, size = 0x1000, scoped, tag = 'output window, operand 0, single buffered']
    %8 = vsyncpa [#allocation4], 0
    %s9 = scalar_lea.sflag [#allocation4], 1
    %10 = vsyncpa %s9, 0
    %11 = vsyncpa [#allocation7], 0
    %s12 = scalar_lea.sflag [#allocation7], 1
    %13 = vsyncpa %s12, 0
    %14 = vsyncpa [#allocation5], 0
    loop: start=0, step=1, limit=4
    $region2: #{tpu_custom_call.1} parent=1 // loop_pre_header
      _
    $region3: #{tpu_custom_call.1} parent=1 // loop_header
      %s16 = sphi 0, %s20
      %p17 = scmp.ge.s32.totalorder %s16, 4
      %s23 = sphi 0, %s35
      %s24 = sphi 0, %s31
      %s25 = sphi 0, %s23
      %s26 = sphi 0, %s24
      %s27 = sphi 0, %s25
      %s28 = sphi 0, %s26
      %s40 = sphi 0, %s42
      %s43 = sphi 0, %s40
      %s44 = sphi 0, %s43
      %s60 = sphi 0, %s44
      %s66 = sphi 0, %s68
      %s69 = sphi 0, %s66
      %s70 = sphi 0, %s69
      %s86 = sphi 0, %s70
      %s90 = sphi 0, %s90
      %s92 = sphi 0, %s90
      %s93 = sphi 0, %s92
      %s107 = sphi 0, %s93
      %s113 = sphi 0, %s115
      %s116 = sphi 0, %s113
      %s117 = sphi 0, %s116
      %s133 = sphi 0, %s117
    $region4: #{tpu_custom_call.1} parent=1 // loop_header_branch
      %19 = sbr.rel (%p17) target = $region8
    $region5: #{tpu_custom_call.1} parent=1 // loop_body
      %s21 = ssub.s32 %s16, 1
      %s22 = ssub.s32 %s16, 2
      %s29 = sadd.s32 1, %s24
      %p30 = scmp.ge.s32.totalorder %s29, 2
      %s31 = scalar_select %p30, 0, %s29
      %s32 = sadd.s32 1, %s23
      %s33 = scalar_select %p30, %s32, %s23
      %p34 = scmp.ge.s32.totalorder %s33, 1
      %s35 = scalar_select %p34, 0, %s33
      %s36 = ssub.s32 %s23, %s35
      %s37 = ssub.s32 %s24, %s31
      %s38 = sor.u32 %s36, %s37
      %p39 = scmp.eq.s32.totalorder %s38, 0
      %s41 = sadd.s32 %s40, 1
      %s42 = scalar_select %p39, %s40, %s41
      %p45 = pneg %p39
      %p46 = scmp.eq.s32.totalorder %s16, 1
      %p47 = por %p45, %p46
      %p48 = scmp.ne.s32.totalorder %s40, %s43
      %p49 = scmp.eq.s32.totalorder %s16, 0
      %p50 = por %p48, %p49
      %p51 = scmp.ne.s32.totalorder %s40, %s43
      %p52 = scmp.eq.s32.totalorder %s21, 1
      %p53 = por %p51, %p52
      %p54 = scmp.ne.s32.totalorder %s43, %s44
      %p55 = scmp.eq.s32.totalorder %s21, 0
      %p56 = por %p54, %p55
      %p57 = scmp.ne.s32.totalorder %s43, %s44
      %p58 = scmp.eq.s32.totalorder %s22, 1
      %p59 = por %p57, %p58
      %p61 = scmp.ne.s32.totalorder %s44, %s60
      %p62 = scmp.eq.s32.totalorder %s22, 0
      %p63 = por %p61, %p62
      %s64 = ssub.s32 %s24, %s31
      %p65 = scmp.eq.s32.totalorder %s64, 0
      %s67 = sadd.s32 %s66, 1
      %s68 = scalar_select %p65, %s66, %s67
      %p71 = pneg %p65
      %p72 = scmp.eq.s32.totalorder %s16, 1
      %p73 = por %p71, %p72
      %p74 = scmp.ne.s32.totalorder %s66, %s69
      %p75 = scmp.eq.s32.totalorder %s16, 0
      %p76 = por %p74, %p75
      %p77 = scmp.ne.s32.totalorder %s66, %s69
      %p78 = scmp.eq.s32.totalorder %s21, 1
      %p79 = por %p77, %p78
      %p80 = scmp.ne.s32.totalorder %s69, %s70
      %p81 = scmp.eq.s32.totalorder %s21, 0
      %p82 = por %p80, %p81
      %p83 = scmp.ne.s32.totalorder %s69, %s70
      %p84 = scmp.eq.s32.totalorder %s22, 1
      %p85 = por %p83, %p84
      %p87 = scmp.ne.s32.totalorder %s70, %s86
      %p88 = scmp.eq.s32.totalorder %s22, 0
      %p89 = por %p87, %p88
      %s91 = sadd.s32 %s90, 1
      %p94 = scmp.eq.s32.totalorder %s16, 1
      %p95 = scmp.ne.s32.totalorder %s90, %s92
      %p96 = scmp.eq.s32.totalorder %s16, 0
      %p97 = por %p95, %p96
      %p98 = scmp.ne.s32.totalorder %s90, %s92
      %p99 = scmp.eq.s32.totalorder %s21, 1
      %p100 = por %p98, %p99
      %p101 = scmp.ne.s32.totalorder %s92, %s93
      %p102 = scmp.eq.s32.totalorder %s21, 0
      %p103 = por %p101, %p102
      %p104 = scmp.ne.s32.totalorder %s92, %s93
      %p105 = scmp.eq.s32.totalorder %s22, 1
      %p106 = por %p104, %p105
      %p108 = scmp.ne.s32.totalorder %s93, %s107
      %p109 = scmp.eq.s32.totalorder %s22, 0
      %p110 = por %p108, %p109
      %s111 = ssub.s32 %s23, %s35
      %p112 = scmp.eq.s32.totalorder %s111, 0
      %s114 = sadd.s32 %s113, 1
      %s115 = scalar_select %p112, %s113, %s114
      %p118 = pneg %p112
      %p119 = scmp.eq.s32.totalorder %s16, 1
      %p120 = por %p118, %p119
      %p121 = scmp.ne.s32.totalorder %s113, %s116
      %p122 = scmp.eq.s32.totalorder %s16, 0
      %p123 = por %p121, %p122
      %p124 = scmp.ne.s32.totalorder %s113, %s116
      %p125 = scmp.eq.s32.totalorder %s21, 1
      %p126 = por %p124, %p125
      %p127 = scmp.ne.s32.totalorder %s116, %s117
      %p128 = scmp.eq.s32.totalorder %s21, 0
      %p129 = por %p127, %p128
      %p130 = scmp.ne.s32.totalorder %s116, %s117
      %p131 = scmp.eq.s32.totalorder %s22, 1
      %p132 = por %p130, %p131
      %p134 = scmp.ne.s32.totalorder %s117, %s133
      %p135 = scmp.eq.s32.totalorder %s22, 0
      %p136 = por %p134, %p135
      %p137 = scmp.le.s32.totalorder 1, %s16
      %p138 = scmp.lt.s32.totalorder %s16, 3
      %p139 = pnand %p137, %p138
      %p140 = pneg %p139
      // Predicated region
      $region9: #{tpu_custom_call.1} parent=5 // pred_check
        _
      $region10: #{tpu_custom_call.1} parent=5 // pred_check_branch
        %142 = sbr.rel (%p139) target = $region12
      $region11: #{tpu_custom_call.1} parent=5 // pred_region
        %s143 = ssub.s32 %s16, 1
        // Predicated region
        $region13: #{tpu_custom_call.1} parent=11 // pred_check
          %p144 = pneg %p103
        $region14: #{tpu_custom_call.1} parent=11 // pred_check_branch
          %146 = sbr.rel (%p144) target = $region16
        $region15: #{tpu_custom_call.1} parent=11 // pred_region
          _
        $region16: #{tpu_custom_call.1} parent=11 // pred_fallthru
          _
      $region12: #{tpu_custom_call.1} parent=5 // pred_fallthru
        _
      %p147 = scmp.lt.s32.totalorder %s16, 2
      // Predicated region
      $region17: #{tpu_custom_call.1} parent=5 // pred_check
        %p148 = pneg %p147
      $region18: #{tpu_custom_call.1} parent=5 // pred_check_branch
        %150 = sbr.rel (%p148) target = $region20
      $region19: #{tpu_custom_call.1} parent=5 // pred_region
        // Predicated region
        $region21: #{tpu_custom_call.1} parent=19 // pred_check
          %p151 = pneg %p50
        $region22: #{tpu_custom_call.1} parent=19 // pred_check_branch
          %153 = sbr.rel (%p151) target = $region24
        $region23: #{tpu_custom_call.1} parent=19 // pred_region
          %s154 = sand.u32 %s40, 1
          %s155 = scalar_lea.sflag [#allocation4], %s154
          %s156 = sand.u32 %s40, 1
          %s157 = smul.addr %s156, 32
          %s158 = scalar_lea.vmem [#allocation3], %s157
          %s159 = smul.u32 4, %s24
          %s161 = ssub.s32 512, 512
          %162 = vsyncadd %s155, %s161
          %s163 = smul.addr %s23, 8
          %s164 = sadd.s32 %s159, %s163
          %s165 = smul.addr %s164, 128
          %s166 = scalar_lea.hbm %s0, %s165
          %s168 = sshll.u32 %s158, 4
          %s169 = int_to_ptr.vmem [resolvable:$true] %s168
          %171 = dma.hbm_to_vmem [thread:$0]  %s166, 512, %s169, %s155
        $region24: #{tpu_custom_call.1} parent=19 // pred_fallthru
          _
        // Predicated region
        $region25: #{tpu_custom_call.1} parent=19 // pred_check
          %p172 = pneg %p76
        $region26: #{tpu_custom_call.1} parent=19 // pred_check_branch
          %174 = sbr.rel (%p172) target = $region28
        $region27: #{tpu_custom_call.1} parent=19 // pred_region
          %s175 = sand.u32 %s66, 1
          %s176 = scalar_lea.sflag [#allocation7], %s175
          %s177 = sand.u32 %s66, 1
          %s178 = smul.addr %s177, 512
          %s179 = scalar_lea.vmem [#allocation6], %s178
          %s180 = smul.u32 4, %s24
          %s182 = ssub.s32 8192, 8192
          %183 = vsyncadd %s176, %s182
          %s184 = smul.addr %s180, 128
          %s185 = scalar_lea.hbm %s1, %s184
          %s186 = sshll.u32 %s179, 4
          %s187 = int_to_ptr.vmem [resolvable:$true] %s186
          %192 = dma.hbm_to_vmem [thread:$0]  %s185, 8192, %s187, %s176, 1024, 512, 32
        $region28: #{tpu_custom_call.1} parent=19 // pred_fallthru
          _
      $region20: #{tpu_custom_call.1} parent=5 // pred_fallthru
        _
      %p193 = scmp.le.s32.totalorder 1, %s16
      %p194 = scmp.lt.s32.totalorder %s16, 3
      %p195 = pnand %p193, %p194
      %p196 = pneg %p195
      // Predicated region
      $region29: #{tpu_custom_call.1} parent=5 // pred_check
        _
      $region30: #{tpu_custom_call.1} parent=5 // pred_check_branch
        %198 = sbr.rel (%p195) target = $region32
      $region31: #{tpu_custom_call.1} parent=5 // pred_region
        %s199 = ssub.s32 %s16, 1
        %s200 = sand.u32 %s43, 1
        %s201 = scalar_lea.sflag [#allocation4], %s200
        %s202 = sand.u32 %s43, 1
        %s203 = smul.addr %s202, 32
        %s204 = scalar_lea.vmem [#allocation3], %s203
        // Predicated region
        $region33: #{tpu_custom_call.1} parent=31 // pred_check
          %p205 = pneg %p56
        $region34: #{tpu_custom_call.1} parent=31 // pred_check_branch
          %207 = sbr.rel (%p205) target = $region36
        $region35: #{tpu_custom_call.1} parent=31 // pred_region
          %208 = dma.done %s201, 512
        $region36: #{tpu_custom_call.1} parent=31 // pred_fallthru
          _
        %s209 = sand.u32 %s69, 1
        %s210 = scalar_lea.sflag [#allocation7], %s209
        %s211 = sand.u32 %s69, 1
        %s212 = smul.addr %s211, 512
        %s213 = scalar_lea.vmem [#allocation6], %s212
        // Predicated region
        $region37: #{tpu_custom_call.1} parent=31 // pred_check
          %p214 = pneg %p82
        $region38: #{tpu_custom_call.1} parent=31 // pred_check_branch
          %216 = sbr.rel (%p214) target = $region40
        $region39: #{tpu_custom_call.1} parent=31 // pred_region
          %217 = dma.done %s210, 8192
        $region40: #{tpu_custom_call.1} parent=31 // pred_fallthru
          _
        %s218 = sand.u32 %s43, 1
        %s219 = scalar_lea.sflag [#allocation4], %s218
        %s220 = sand.u32 %s43, 1
        %s221 = smul.addr %s220, 32
        %s222 = scalar_lea.vmem [#allocation3], %s221
        %p223 = pneg %p56
        %p224 = pneg %p53
        %s225 = sand.u32 %s69, 1
        %s226 = scalar_lea.sflag [#allocation7], %s225
        %s227 = sand.u32 %s69, 1
        %s228 = smul.addr %s227, 512
        %s229 = scalar_lea.vmem [#allocation6], %s228
        %p230 = pneg %p82
        %p231 = pneg %p79
        %p232 = pneg %p103
        %p233 = pneg %p100
        %p234 = pneg %p129
        %p235 = pneg %p126
        %s236 = smul.u32 4, %s26
        %s237 = smul.u32 4, %s26
        %p238 = scmp.eq.s32.totalorder %s26, 0
        // Predicated region
        $region41: #{tpu_custom_call.1} parent=31 // pred_check
          %p239 = pneg %p238
        $region42: #{tpu_custom_call.1} parent=31 // pred_check_branch
          %241 = sbr.rel (%p239) target = $region44
        $region43: #{tpu_custom_call.1} parent=31 // pred_region
          %242 = vst [vmem:[#allocation2] sm:$0xff] 0.0
        $region44: #{tpu_custom_call.1} parent=31 // pred_fallthru
          _
        %v243 = vld [vmem:[#allocation2] sm:$0xff]
        %v244 = vld [vmem:[%s204] sm:$0xff]
        %v245 = vld [vmem:[%s204 + $0x8] sm:$0xff]
        %v246 = vld [vmem:[%s204 + $0x10] sm:$0xff]
        %v247 = vld [vmem:[%s204 + $0x18] sm:$0xff]
        %v248 = vld [vmem:[%s213] sm:$0xff]
        %v249 = vld [vmem:[%s213 + $0x8] sm:$0xff]
        %v250 = vld [vmem:[%s213 + $0x10] sm:$0xff]
        %v251 = vld [vmem:[%s213 + $0x18] sm:$0xff]
        %v252 = vld [vmem:[%s213 + $0x20] sm:$0xff]
        %v253 = vld [vmem:[%s213 + $0x28] sm:$0xff]
        %v254 = vld [vmem:[%s213 + $0x30] sm:$0xff]
        %v255 = vld [vmem:[%s213 + $0x38] sm:$0xff]
        %v256 = vld [vmem:[%s213 + $0x40] sm:$0xff]
        %v257 = vld [vmem:[%s213 + $0x48] sm:$0xff]
        %v258 = vld [vmem:[%s213 + $0x50] sm:$0xff]
        %v259 = vld [vmem:[%s213 + $0x58] sm:$0xff]
        %v260 = vld [vmem:[%s213 + $0x60] sm:$0xff]
        %v261 = vld [vmem:[%s213 + $0x68] sm:$0xff]
        %v262 = vld [vmem:[%s213 + $0x70] sm:$0xff]
        %v263 = vld [vmem:[%s213 + $0x78] sm:$0xff]
        %v264 = vld [vmem:[%s213 + $0x80] sm:$0xff]
        %v265 = vld [vmem:[%s213 + $0x88] sm:$0xff]
        %v266 = vld [vmem:[%s213 + $0x90] sm:$0xff]
        %v267 = vld [vmem:[%s213 + $0x98] sm:$0xff]
        %v268 = vld [vmem:[%s213 + $0xa0] sm:$0xff]
        %v269 = vld [vmem:[%s213 + $0xa8] sm:$0xff]
        %v270 = vld [vmem:[%s213 + $0xb0] sm:$0xff]
        %v271 = vld [vmem:[%s213 + $0xb8] sm:$0xff]
        %v272 = vld [vmem:[%s213 + $0xc0] sm:$0xff]
        %v273 = vld [vmem:[%s213 + $0xc8] sm:$0xff]
        %v274 = vld [vmem:[%s213 + $0xd0] sm:$0xff]
        %v275 = vld [vmem:[%s213 + $0xd8] sm:$0xff]
        %v276 = vld [vmem:[%s213 + $0xe0] sm:$0xff]
        %v277 = vld [vmem:[%s213 + $0xe8] sm:$0xff]
        %v278 = vld [vmem:[%s213 + $0xf0] sm:$0xff]
        %v279 = vld [vmem:[%s213 + $0xf8] sm:$0xff]
        %v280 = vld [vmem:[%s213 + $0x100] sm:$0xff]
        %v281 = vld [vmem:[%s213 + $0x108] sm:$0xff]
        %v282 = vld [vmem:[%s213 + $0x110] sm:$0xff]
        %v283 = vld [vmem:[%s213 + $0x118] sm:$0xff]
        %v284 = vld [vmem:[%s213 + $0x120] sm:$0xff]
        %v285 = vld [vmem:[%s213 + $0x128] sm:$0xff]
        %v286 = vld [vmem:[%s213 + $0x130] sm:$0xff]
        %v287 = vld [vmem:[%s213 + $0x138] sm:$0xff]
        %v288 = vld [vmem:[%s213 + $0x140] sm:$0xff]
        %v289 = vld [vmem:[%s213 + $0x148] sm:$0xff]
        %v290 = vld [vmem:[%s213 + $0x150] sm:$0xff]
        %v291 = vld [vmem:[%s213 + $0x158] sm:$0xff]
        %v292 = vld [vmem:[%s213 + $0x160] sm:$0xff]
        %v293 = vld [vmem:[%s213 + $0x168] sm:$0xff]
        %v294 = vld [vmem:[%s213 + $0x170] sm:$0xff]
        %v295 = vld [vmem:[%s213 + $0x178] sm:$0xff]
        %v296 = vld [vmem:[%s213 + $0x180] sm:$0xff]
        %v297 = vld [vmem:[%s213 + $0x188] sm:$0xff]
        %v298 = vld [vmem:[%s213 + $0x190] sm:$0xff]
        %v299 = vld [vmem:[%s213 + $0x198] sm:$0xff]
        %v300 = vld [vmem:[%s213 + $0x1a0] sm:$0xff]
        %v301 = vld [vmem:[%s213 + $0x1a8] sm:$0xff]
        %v302 = vld [vmem:[%s213 + $0x1b0] sm:$0xff]
        %v303 = vld [vmem:[%s213 + $0x1b8] sm:$0xff]
        %v304 = vld [vmem:[%s213 + $0x1c0] sm:$0xff]
        %v305 = vld [vmem:[%s213 + $0x1c8] sm:$0xff]
        %v306 = vld [vmem:[%s213 + $0x1d0] sm:$0xff]
        %v307 = vld [vmem:[%s213 + $0x1d8] sm:$0xff]
        %v308 = vld [vmem:[%s213 + $0x1e0] sm:$0xff]
        %v309 = vld [vmem:[%s213 + $0x1e8] sm:$0xff]
        %v310 = vld [vmem:[%s213 + $0x1f0] sm:$0xff]
        %v311 = vld [vmem:[%s213 + $0x1f8] sm:$0xff]
        %312 = vmatprep.subr.mxu0 %v249
        %313 = vmatpush1.xpose.msra.mxu0 %v248
        %314 = vmatprep.subr.mxu0 %v253
        %315 = vmatpush1.xpose.msra.mxu0 %v252
        %316 = vmatprep.subr.mxu0 %v257
        %317 = vmatpush1.xpose.msra.mxu0 %v256
        %318 = vmatprep.subr.mxu0 %v261
        %319 = vmatpush1.xpose.msra.mxu0 %v260
        %320 = vmatprep.subr.mxu0 %v265
        %321 = vmatpush1.xpose.msra.mxu0 %v264
        %322 = vmatprep.subr.mxu0 %v269
        %323 = vmatpush1.xpose.msra.mxu0 %v268
        %324 = vmatprep.subr.mxu0 %v273
        %325 = vmatpush1.xpose.msra.mxu0 %v272
        %326 = vmatprep.subr.mxu0 %v277
        %327 = vmatpush1.xpose.msra.mxu0 %v276
        %328 = vmatprep.subr.mxu0 %v281
        %329 = vmatpush1.xpose.msra.mxu0 %v280
        %330 = vmatprep.subr.mxu0 %v285
        %331 = vmatpush1.xpose.msra.mxu0 %v284
        %332 = vmatprep.subr.mxu0 %v289
        %333 = vmatpush1.xpose.msra.mxu0 %v288
        %334 = vmatprep.subr.mxu0 %v293
        %335 = vmatpush1.xpose.msra.mxu0 %v292
        %336 = vmatprep.subr.mxu0 %v297
        %337 = vmatpush1.xpose.msra.mxu0 %v296
        %338 = vmatprep.subr.mxu0 %v301
        %339 = vmatpush1.xpose.msra.mxu0 %v300
        %340 = vmatprep.subr.mxu0 %v305
        %341 = vmatpush1.xpose.msra.mxu0 %v304
        %342 = vmatprep.subr.mxu0 %v309
        %343 = vmatpush1.xpose.msra.mxu0 %v308
        %344 = vmatprep.subr.mxu0 0.0
        %345 = vmatpush1.xpose.msra.mxu0 0.0
        %346 = vmatprep.subr.mxu0 0.0
        %347 = vmatpush1.xpose.msra.mxu0 0.0
        %348 = vmatprep.subr.mxu0 0.0
        %349 = vmatpush1.xpose.msra.mxu0 0.0
        %350 = vmatprep.subr.mxu0 0.0
        %351 = vmatpush1.xpose.msra.mxu0 0.0
        %352 = vmatprep.subr.mxu0 0.0
        %353 = vmatpush1.xpose.msra.mxu0 0.0
        %354 = vmatprep.subr.mxu0 0.0
        %355 = vmatpush1.xpose.msra.mxu0 0.0
        %356 = vmatprep.subr.mxu0 0.0
        %357 = vmatpush1.xpose.msra.mxu0 0.0
        %358 = vmatprep.subr.mxu0 0.0
        %359 = vmatpush1.xpose.msra.mxu0 0.0
        %360 = vmatprep.subr.mxu0 0.0
        %361 = vmatpush1.xpose.msra.mxu0 0.0
        %362 = vmatprep.subr.mxu0 0.0
        %363 = vmatpush1.xpose.msra.mxu0 0.0
        %364 = vmatprep.subr.mxu0 0.0
        %365 = vmatpush1.xpose.msra.mxu0 0.0
        %366 = vmatprep.subr.mxu0 0.0
        %367 = vmatpush1.xpose.msra.mxu0 0.0
        %368 = vmatprep.subr.mxu0 0.0
        %369 = vmatpush1.xpose.msra.mxu0 0.0
        %370 = vmatprep.subr.mxu0 0.0
        %371 = vmatpush1.xpose.msra.mxu0 0.0
        %372 = vmatprep.subr.mxu0 0.0
        %373 = vmatpush1.xpose.msra.mxu0 0.0
        %374 = vmatprep.subr.mxu0 0.0
        %375 = vmatpush1.xpose.msra.mxu0 0.0
        %376 = vmatprep.mubr.f32.mxu0 %v245
        %377 = vmatmul.mubr.f32.gmra.mrb[0].mxu0 %v244
        %v378 = vpop.f32.mrb[0].mxu0
        %v379 = vadd.f32 0.0, %v378
        %v380 = vpop.f32.mrb[0].mxu0
        %381 = vdwg.mxu0
        %382 = vmatprep.subr.mxu0 %v251
        %383 = vmatpush1.xpose.msra.mxu0 %v250
        %384 = vmatprep.subr.mxu0 %v255
        %385 = vmatpush1.xpose.msra.mxu0 %v254
        %386 = vmatprep.subr.mxu0 %v259
        %387 = vmatpush1.xpose.msra.mxu0 %v258
        %388 = vmatprep.subr.mxu0 %v263
        %389 = vmatpush1.xpose.msra.mxu0 %v262
        %390 = vmatprep.subr.mxu0 %v267
        %391 = vmatpush1.xpose.msra.mxu0 %v266
        %392 = vmatprep.subr.mxu0 %v271
        %393 = vmatpush1.xpose.msra.mxu0 %v270
        %394 = vmatprep.subr.mxu0 %v275
        %395 = vmatpush1.xpose.msra.mxu0 %v274
        %396 = vmatprep.subr.mxu0 %v279
        %397 = vmatpush1.xpose.msra.mxu0 %v278
        %398 = vmatprep.subr.mxu0 %v283
        %399 = vmatpush1.xpose.msra.mxu0 %v282
        %400 = vmatprep.subr.mxu0 %v287
        %401 = vmatpush1.xpose.msra.mxu0 %v286
        %402 = vmatprep.subr.mxu0 %v291
        %403 = vmatpush1.xpose.msra.mxu0 %v290
        %404 = vmatprep.subr.mxu0 %v295
        %405 = vmatpush1.xpose.msra.mxu0 %v294
        %406 = vmatprep.subr.mxu0 %v299
        %407 = vmatpush1.xpose.msra.mxu0 %v298
        %408 = vmatprep.subr.mxu0 %v303
        %409 = vmatpush1.xpose.msra.mxu0 %v302
        %410 = vmatprep.subr.mxu0 %v307
        %411 = vmatpush1.xpose.msra.mxu0 %v306
        %412 = vmatprep.subr.mxu0 %v311
        %413 = vmatpush1.xpose.msra.mxu0 %v310
        %414 = vmatprep.subr.mxu0 0.0
        %415 = vmatpush1.xpose.msra.mxu0 0.0
        %416 = vmatprep.subr.mxu0 0.0
        %417 = vmatpush1.xpose.msra.mxu0 0.0
        %418 = vmatprep.subr.mxu0 0.0
        %419 = vmatpush1.xpose.msra.mxu0 0.0
        %420 = vmatprep.subr.mxu0 0.0
        %421 = vmatpush1.xpose.msra.mxu0 0.0
        %422 = vmatprep.subr.mxu0 0.0
        %423 = vmatpush1.xpose.msra.mxu0 0.0
        %424 = vmatprep.subr.mxu0 0.0
        %425 = vmatpush1.xpose.msra.mxu0 0.0
        %426 = vmatprep.subr.mxu0 0.0
        %427 = vmatpush1.xpose.msra.mxu0 0.0
        %428 = vmatprep.subr.mxu0 0.0
        %429 = vmatpush1.xpose.msra.mxu0 0.0
        %430 = vmatprep.subr.mxu0 0.0
        %431 = vmatpush1.xpose.msra.mxu0 0.0
        %432 = vmatprep.subr.mxu0 0.0
        %433 = vmatpush1.xpose.msra.mxu0 0.0
        %434 = vmatprep.subr.mxu0 0.0
        %435 = vmatpush1.xpose.msra.mxu0 0.0
        %436 = vmatprep.subr.mxu0 0.0
        %437 = vmatpush1.xpose.msra.mxu0 0.0
        %438 = vmatprep.subr.mxu0 0.0
        %439 = vmatpush1.xpose.msra.mxu0 0.0
        %440 = vmatprep.subr.mxu0 0.0
        %441 = vmatpush1.xpose.msra.mxu0 0.0
        %442 = vmatprep.subr.mxu0 0.0
        %443 = vmatpush1.xpose.msra.mxu0 0.0
        %444 = vmatprep.subr.mxu0 0.0
        %445 = vmatpush1.xpose.msra.mxu0 0.0
        %446 = vmatprep.mubr.f32.mxu0 %v247
        %447 = vmatmul.mubr.f32.gmra.mrb[0].mxu0 %v246
        %v448 = vpop.f32.mrb[0].mxu0
        %v449 = vadd.f32 %v379, %v448
        %v450 = vpop.f32.mrb[0].mxu0
        %451 = vdwg.mxu0
        %v452 = vadd.f32 %v243, %v449
        %453 = vst [vmem:[#allocation2] sm:$0xff] %v452
        %p454 = scmp.eq.s32.totalorder %s26, 1
        // Predicated region
        $region45: #{tpu_custom_call.1} parent=31 // pred_check
          %p455 = pneg %p454
        $region46: #{tpu_custom_call.1} parent=31 // pred_check_branch
          %457 = sbr.rel (%p455) target = $region48
        $region47: #{tpu_custom_call.1} parent=31 // pred_region
          %v458 = vld [vmem:[#allocation2] sm:$0xff]
          %v459 = vld [vmem:[%s2] sm:$0x1]
          %v461 = vlaneseq
          %v462 = vshrl.u32 %v461, 7
          %v463 = vsub.s32 0, %v462
          %v464 = vrot.slane %v459, %v463
          %v466 = vadd.f32 %v458, %v464
          %v467 = vmax.f32 %v466, 0.0
          %468 = vst [vmem:[#allocation8] sm:$0xff] %v467
        $region48: #{tpu_custom_call.1} parent=31 // pred_fallthru
          _
        // Predicated region
        $region49: #{tpu_custom_call.1} parent=31 // pred_check
          %p469 = pneg %p126
        $region50: #{tpu_custom_call.1} parent=31 // pred_check_branch
          %471 = sbr.rel (%p469) target = $region52
        $region51: #{tpu_custom_call.1} parent=31 // pred_region
          %s473 = ssub.s32 128, 128
          %474 = vsyncadd [#allocation5], %s473
          %s475 = smul.addr %s25, 128
          %s476 = scalar_lea.hbm %s3, %s475
          %s478 = sshll.u32 [#allocation8], 4
          %s479 = int_to_ptr.vmem [resolvable:$true] %s478
          %481 = dma.vmem_to_hbm [thread:$0]  %s479, 128, %s476, [#allocation5]
        $region52: #{tpu_custom_call.1} parent=31 // pred_fallthru
          _
        // Predicated region
        $region53: #{tpu_custom_call.1} parent=31 // pred_check
          %p482 = pneg %p126
        $region54: #{tpu_custom_call.1} parent=31 // pred_check_branch
          %484 = sbr.rel (%p482) target = $region56
        $region55: #{tpu_custom_call.1} parent=31 // pred_region
          %485 = dma.done [#allocation5], 128
        $region56: #{tpu_custom_call.1} parent=31 // pred_fallthru
          _
      $region32: #{tpu_custom_call.1} parent=5 // pred_fallthru
        _
      %p486 = scmp.le.s32.totalorder 2, %s16
      // Predicated region
      $region57: #{tpu_custom_call.1} parent=5 // pred_check
        %p487 = pneg %p486
      $region58: #{tpu_custom_call.1} parent=5 // pred_check_branch
        %489 = sbr.rel (%p487) target = $region60
      $region59: #{tpu_custom_call.1} parent=5 // pred_region
        %s490 = ssub.s32 %s16, 2
      $region60: #{tpu_custom_call.1} parent=5 // pred_fallthru
        _
    $region6: #{tpu_custom_call.1} parent=1 // loop_footer
      %s20 = sadd.s32 1, %s16
    $region7: #{tpu_custom_call.1} parent=1 // loop_footer_branch
      %15 = sbr.rel target = $region3
    $region8: #{tpu_custom_call.1} parent=1 // loop_exit
      _
    %491 = vsyncpa [#allocation4], 1
    %s492 = scalar_lea.sflag [#allocation4], 1
    %493 = vsyncpa %s492, 1
    %494 = vsyncpa [#allocation7], 1
    %s495 = scalar_lea.sflag [#allocation7], 1
    %496 = vsyncpa %s495, 1
    %497 = vsyncpa [#allocation5], 1
    %s498 = scalar_lea.sflag [#allocation5], 1
    %499 = vsyncpa %s498, 1

</llo_original>
